<compile_context>
chip_gen: v6e
topology: v6e:2x2x1
jax: 0.10.0
libtpu: 0.0.40
codegen_flags: <defaults>
</compile_context>

<pallas_src>
import jax
import jax.numpy as jnp
from jax import lax
from jax.experimental import pallas as pl
from jax.experimental.pallas import tpu as pltpu


def _round_up(x, m):
    return ((x + m - 1) // m) * m


def _vmem_budget_bytes():
    """Physical VMEM per TensorCore with ~25% headroom for Mosaic internals."""
    try:
        info = pltpu.get_tpu_info()
        phys = getattr(info, "vmem_capacity_bytes", None)
        if phys:
            return int(phys * 0.75)
    except Exception:
        pass
    # Conservative fallback: assume the smallest VMEM (v7x, 64 MiB per TC).
    return int((64 << 20) * 0.75)


def _vmem_footprint(tm, tn, k_pad, r_pad, in_isz, out_isz):
    """Estimated VMEM bytes for one grid step: double-buffered blocks,
    f32 MXU result temporaries, the persistent down scratch, plus headroom."""
    x_t = tm * k_pad * in_isz
    w_t = tn * k_pad * in_isz
    b_t = tn * 4
    bu_t = tn * r_pad * in_isz
    a_t = r_pad * k_pad * in_isz
    o_t = tm * tn * out_isz
    dbuf = 2 * (x_t + w_t + b_t + bu_t + o_t) + 2 * a_t
    f32_tmp = 2 * tm * tn * 4 + tm * r_pad * 4      # base/up tiles + down result
    scratch = tm * r_pad * in_isz                    # persistent down scratch
    return int((dbuf + f32_tmp + scratch) * 1.25)


def _pick_tiles(out_dim, k_pad, r_pad, in_isz, out_isz, tm_hint, tn_hint, vmem_cap):
    sub = 16 if in_isz == 2 else 8
    tm = max(sub, _round_up(tm_hint, sub))
    n128 = _round_up(out_dim, 128)
    # Best case for HBM traffic: the whole padded W slab stays VMEM-resident
    # (single N tile), so W is DMA'd from HBM exactly once for the whole grid.
    if _vmem_footprint(tm, n128, k_pad, r_pad, in_isz, out_isz) <= vmem_cap:
        return tm, n128
    tn = min(max(128, tn_hint), n128)
    while tn > 128 and _vmem_footprint(tm, tn, k_pad, r_pad, in_isz, out_isz) > vmem_cap:
        tn = max(128, tn // 2)
    while tm > sub and _vmem_footprint(tm, tn, k_pad, r_pad, in_isz, out_isz) > vmem_cap:
        tm = max(sub, tm // 2)
    return tm, tn


def _lora_linear_kernel(x_ref, w_ref, b_ref, a_ref, bu_ref, o_ref, down_ref):
    """One (tm, tn) output tile of  x @ W^T + b + (x @ A^T) @ (scale*B)^T.

    The down-projection depends only on the M-tile index i, so it is computed
    once per i (when j == 0) into VMEM scratch and reused across all N tiles
    (the grid iterates j innermost)."""
    dn = (((1,), (1,)), ((), ()))                    # contract last axes of both

    @pl.when(pl.program_id(1) == 0)
    def _():
        down = lax.dot_general(x_ref[...], a_ref[...], dn,
                               preferred_element_type=jnp.float32)   # [tm, R]
        down_ref[...] = down.astype(down_ref.dtype)

    base = lax.dot_general(x_ref[...], w_ref[...], dn,
                           preferred_element_type=jnp.float32)        # [tm, tn]
    up = lax.dot_general(down_ref[...], bu_ref[...], dn,
                         preferred_element_type=jnp.float32)          # [tm, tn]

    # Epilogue in f32, single cast at the store.
    o_ref[...] = (base + b_ref[...] + up).astype(o_ref.dtype)


def prepare_lora_linear(w, bias, lora_down, lora_up, scale, *,
                        tm=512, tn=512, compute_dtype=None, out_dtype=None):
    """Pad / scale-fold / cast the frozen weights ONCE per layer (cache this).

    w:         [OUT, IN]  frozen nn.Linear weight (PyTorch layout)
    bias:      [OUT]
    lora_down: [R, IN]
    lora_up:   [OUT, R]   (scale = alpha/rank is folded in here)
    """
    OUT, K = w.shape
    R = lora_down.shape[0]
    assert lora_down.shape == (R, K) and lora_up.shape == (OUT, R)
    assert bias.shape == (OUT,)

    cdt = jnp.dtype(compute_dtype) if compute_dtype is not None else jnp.dtype(w.dtype)
    odt = jnp.dtype(out_dtype) if out_dtype is not None else cdt

    k_pad = _round_up(K, 128)
    r_pad = _round_up(R, 128)
    vmem_cap = _vmem_budget_bytes()
    tm_eff, tn_eff = _pick_tiles(OUT, k_pad, r_pad, cdt.itemsize, odt.itemsize,
                                 tm, tn, vmem_cap)
    n_pad = _round_up(OUT, tn_eff)

    def pad2(arr, rows, cols):
        r0, c0 = arr.shape
        if (r0, c0) != (rows, cols):
            arr = jnp.pad(arr, ((0, rows - r0), (0, cols - c0)))
        return arr

    bu_scaled = lora_up.astype(jnp.float32) * jnp.float32(scale)

    return dict(
        w=pad2(w.astype(cdt), n_pad, k_pad),
        b=jnp.pad(bias.astype(jnp.float32), (0, n_pad - OUT)).reshape(1, n_pad),
        a=pad2(lora_down.astype(cdt), r_pad, k_pad),
        bu=pad2(bu_scaled.astype(cdt), n_pad, r_pad),
        dims=(OUT, K, R, n_pad, k_pad, r_pad),
        tiles=(tm_eff, tn_eff),
        compute_dtype=cdt, out_dtype=odt, vmem_cap=vmem_cap,
    )


def lora_linear(x, prepped):
    """Fused Linear + LoRA on pre-padded frozen weights.  x: [M, IN]."""
    OUT, K, _R, n_pad, k_pad, r_pad = prepped["dims"]
    tm_hint, tn_eff = prepped["tiles"]
    cdt, odt = prepped["compute_dtype"], prepped["out_dtype"]

    M, Kx = x.shape
    assert Kx == K

    sub = 16 if cdt.itemsize == 2 else 8
    tm_eff = min(tm_hint, _round_up(M, sub))
    m_pad = _round_up(M, tm_eff)

    x_p = x.astype(cdt)
    if (m_pad, k_pad) != (M, K):
        x_p = jnp.pad(x_p, ((0, m_pad - M), (0, k_pad - K)))

    grid = (m_pad // tm_eff, n_pad // tn_eff)
    footprint = _vmem_footprint(tm_eff, tn_eff, k_pad, r_pad,
                                cdt.itemsize, odt.itemsize)
    vmem_limit = int(min(prepped["vmem_cap"], max(footprint, 16 << 20)))

    y = pl.pallas_call(
        _lora_linear_kernel,
        out_shape=jax.ShapeDtypeStruct((m_pad, n_pad), odt),
        grid_spec=pltpu.PrefetchScalarGridSpec(
            num_scalar_prefetch=0,
            grid=grid,
            in_specs=[
                pl.BlockSpec((tm_eff, k_pad), lambda i, j: (i, 0)),   # x
                pl.BlockSpec((tn_eff, k_pad), lambda i, j: (j, 0)),   # W [OUT,IN]
                pl.BlockSpec((1, tn_eff),     lambda i, j: (0, j)),   # bias (f32)
                pl.BlockSpec((r_pad, k_pad),  lambda i, j: (0, 0)),   # lora_down
                pl.BlockSpec((tn_eff, r_pad), lambda i, j: (j, 0)),   # scale*lora_up
            ],
            out_specs=pl.BlockSpec((tm_eff, tn_eff), lambda i, j: (i, j)),
            scratch_shapes=[pltpu.VMEM((tm_eff, r_pad), cdt)],        # down scratch
        ),
        compiler_params=pltpu.CompilerParams(
            # N axis carries the down scratch -> "arbitrary"; M stays
            # "parallel" so v7x's two TensorCores still split the grid.
            dimension_semantics=("parallel", "arbitrary"),
            vmem_limit_bytes=vmem_limit),
    )(x_p, prepped["w"], prepped["b"], prepped["a"], prepped["bu"])

    return y[:M, :OUT]


def lora_wrapper_forward(x_bsd, params, *, prepped=None, tm=512, tn=512,
                         compute_dtype=None):
    """LoRAWrapper.forward: original_linear(x) + lora(x), x: [B, S, IN]."""
    B, S, IN = x_bsd.shape
    if prepped is None:   # in real use, prepare once per layer and cache.
        prepped = prepare_lora_linear(
            params["w"], params["b"], params["lora_down"], params["lora_up"],
            params["scale"], tm=tm, tn=tn,
            compute_dtype=compute_dtype, out_dtype=x_bsd.dtype)
    OUT = prepped["dims"][0]
    y2d = lora_linear(x_bsd.reshape(B * S, IN), prepped)
    return y2d.reshape(B, S, OUT)


if __name__ == "__main__":
    # Small shapes implied by the forward: a Linear-style LoRA adapter.
    B, S, IN, OUT, R = 2, 8, 32, 32, 4
    alpha = 8.0
    scale = alpha / R

    key = jax.random.PRNGKey(0)
    kx, kw, kb, kd, ku = jax.random.split(key, 5)

    x = jax.random.normal(kx, (B, S, IN), jnp.float32)
    params = {
        # PyTorch layouts: Linear weight [OUT, IN], lora_down [R, IN], lora_up [OUT, R]
        "w": jax.random.normal(kw, (OUT, IN), jnp.float32) * 0.05,
        "b": jax.random.normal(kb, (OUT,), jnp.float32) * 0.05,
        "lora_down": jax.random.normal(kd, (R, IN), jnp.float32) * 0.05,
        # Real LoRA inits lora_up to zeros; use small random values so the
        # LoRA branch actually exercises the kernel.
        "lora_up": jax.random.normal(ku, (OUT, R), jnp.float32) * 0.05,
        "scale": scale,
    }

    # Frozen weights prepared once (pad + scale-fold + cast) and reused.
    prepped = prepare_lora_linear(params["w"], params["b"], params["lora_down"],
                                  params["lora_up"], params["scale"],
                                  out_dtype=x.dtype)

    y = lora_wrapper_forward(x, params, prepped=prepped)
    y = jax.block_until_ready(y)

    # Pure-JAX reference for correctness.
    x2d = x.reshape(B * S, IN)
    ref = (x2d @ params["w"].T + params["b"]
           + scale * (x2d @ params["lora_down"].T) @ params["lora_up"].T)
    ref = ref.reshape(B, S, OUT)
    assert y.shape == (B, S, OUT)
    assert jnp.allclose(y, ref, atol=2e-5, rtol=2e-5)

    print("KERNEL_OK")
</pallas_src>

<mosaic_0001>
module attributes {stable_mosaic.version = 11 : i64} {
  func.func @_lora_linear_kernel(%arg0: i32, %arg1: i32, %arg2: memref<16x128xf32, #tpu.memory_space<vmem>>, %arg3: memref<128x128xf32, #tpu.memory_space<vmem>>, %arg4: memref<1x128xf32, #tpu.memory_space<vmem>>, %arg5: memref<128x128xf32, #tpu.memory_space<vmem>>, %arg6: memref<128x128xf32, #tpu.memory_space<vmem>>, %arg7: memref<16x128xf32, #tpu.memory_space<vmem>>, %arg8: memref<16x128xf32, #tpu.memory_space<vmem>>) attributes {dimension_semantics = [#tpu.dimension_semantics<parallel>, #tpu.dimension_semantics<arbitrary>], iteration_bounds = array<i64: 1, 1>, scalar_prefetch = 0 : i64, scratch_operands = 1 : i64, tpu.core_type = #tpu.core_type<tc>, window_params = [{transform_indices = @transform_0, window_bounds = array<i64: 16, 128>}, {transform_indices = @transform_1, window_bounds = array<i64: 128, 128>}, {transform_indices = @transform_2, window_bounds = array<i64: 1, 128>}, {pipeline_mode = #tpu.pipeline_mode<synchronous>, transform_indices = @transform_3, window_bounds = array<i64: 128, 128>}, {transform_indices = @transform_4, window_bounds = array<i64: 128, 128>}, {transform_indices = @transform_5, window_bounds = array<i64: 16, 128>}]} {
    %c0_i32 = arith.constant 0 : i32
    %0 = arith.cmpi eq, %arg1, %c0_i32 : i32
    %1 = arith.extui %0 : i1 to i32
    %c0_i32_0 = arith.constant 0 : i32
    %2 = arith.cmpi ne, %1, %c0_i32_0 : i32
    scf.if %2 {
      %c0_13 = arith.constant 0 : index
      %c0_14 = arith.constant 0 : index
      %14 = vector.load %arg2[%c0_13, %c0_14] : memref<16x128xf32, #tpu.memory_space<vmem>>, vector<16x128xf32>
      %c0_15 = arith.constant 0 : index
      %c0_16 = arith.constant 0 : index
      %15 = vector.load %arg5[%c0_15, %c0_16] : memref<128x128xf32, #tpu.memory_space<vmem>>, vector<128x128xf32>
      %cst_17 = arith.constant dense<0.000000e+00> : vector<16x128xf32>
      %16 = tpu.matmul %14, %15, %cst_17 {dimension_numbers = #tpu.dot_dimension_numbers<[1], [1], [0], [0], [0, 0, 1, 0], [], []>} : vector<16x128xf32>, vector<128x128xf32>, vector<16x128xf32> -> vector<16x128xf32>
      %c0_18 = arith.constant 0 : index
      %c0_19 = arith.constant 0 : index
      %17 = vector.load %arg8[%c0_18, %c0_19] : memref<16x128xf32, #tpu.memory_space<vmem>>, vector<16x128xf32>
      tpu.vector_store %arg8[%c0_18, %c0_19], %16 {strides = array<i32>} : memref<16x128xf32, #tpu.memory_space<vmem>>, vector<16x128xf32>,
    } else {
    }
    %c0 = arith.constant 0 : index
    %c0_1 = arith.constant 0 : index
    %3 = vector.load %arg2[%c0, %c0_1] : memref<16x128xf32, #tpu.memory_space<vmem>>, vector<16x128xf32>
    %c0_2 = arith.constant 0 : index
    %c0_3 = arith.constant 0 : index
    %4 = vector.load %arg3[%c0_2, %c0_3] : memref<128x128xf32, #tpu.memory_space<vmem>>, vector<128x128xf32>
    %cst = arith.constant dense<0.000000e+00> : vector<16x128xf32>
    %5 = tpu.matmul %3, %4, %cst {dimension_numbers = #tpu.dot_dimension_numbers<[1], [1], [0], [0], [0, 0, 1, 0], [], []>} : vector<16x128xf32>, vector<128x128xf32>, vector<16x128xf32> -> vector<16x128xf32>
    %c0_4 = arith.constant 0 : index
    %c0_5 = arith.constant 0 : index
    %6 = vector.load %arg8[%c0_4, %c0_5] : memref<16x128xf32, #tpu.memory_space<vmem>>, vector<16x128xf32>
    %c0_6 = arith.constant 0 : index
    %c0_7 = arith.constant 0 : index
    %7 = vector.load %arg6[%c0_6, %c0_7] : memref<128x128xf32, #tpu.memory_space<vmem>>, vector<128x128xf32>
    %cst_8 = arith.constant dense<0.000000e+00> : vector<16x128xf32>
    %8 = tpu.matmul %6, %7, %cst_8 {dimension_numbers = #tpu.dot_dimension_numbers<[1], [1], [0], [0], [0, 0, 1, 0], [], []>} : vector<16x128xf32>, vector<128x128xf32>, vector<16x128xf32> -> vector<16x128xf32>
    %c0_9 = arith.constant 0 : index
    %c0_10 = arith.constant 0 : index
    %9 = vector.load %arg4[%c0_9, %c0_10] : memref<1x128xf32, #tpu.memory_space<vmem>>, vector<1x128xf32>
    %10 = vector.broadcast %9 : vector<1x128xf32> to vector<16x128xf32>
    %11 = arith.addf %5, %10 : vector<16x128xf32>
    %12 = arith.addf %11, %8 : vector<16x128xf32>
    %c0_11 = arith.constant 0 : index
    %c0_12 = arith.constant 0 : index
    %13 = vector.load %arg7[%c0_11, %c0_12] : memref<16x128xf32, #tpu.memory_space<vmem>>, vector<16x128xf32>
    tpu.vector_store %arg7[%c0_11, %c0_12], %12 {strides = array<i32>} : memref<16x128xf32, #tpu.memory_space<vmem>>, vector<16x128xf32>,
    return
  }
  func.func @transform_0(%arg0: i32, %arg1: i32) -> (i32, i32) {
    %c0_i32 = arith.constant 0 : i32
    %c0_i32_0 = arith.constant 0 : i32
    return %arg0, %c0_i32 : i32, i32
  }
  func.func @transform_1(%arg0: i32, %arg1: i32) -> (i32, i32) {
    %c0_i32 = arith.constant 0 : i32
    %c0_i32_0 = arith.constant 0 : i32
    return %arg1, %c0_i32 : i32, i32
  }
  func.func @transform_2(%arg0: i32, %arg1: i32) -> (i32, i32) {
    %c0_i32 = arith.constant 0 : i32
    %c0_i32_0 = arith.constant 0 : i32
    return %c0_i32, %arg1 : i32, i32
  }
  func.func @transform_3(%arg0: i32, %arg1: i32) -> (i32, i32) {
    %c0_i32 = arith.constant 0 : i32
    %c0_i32_0 = arith.constant 0 : i32
    %c0_i32_1 = arith.constant 0 : i32
    return %c0_i32, %c0_i32_0 : i32, i32
  }
  func.func @transform_4(%arg0: i32, %arg1: i32) -> (i32, i32) {
    %c0_i32 = arith.constant 0 : i32
    %c0_i32_0 = arith.constant 0 : i32
    return %arg1, %c0_i32 : i32, i32
  }
  func.func @transform_5(%arg0: i32, %arg1: i32) -> (i32, i32) {
    %c0_i32 = arith.constant 0 : i32
    return %arg0, %arg1 : i32, i32
  }
}

</mosaic_0001>

<llo_original>
// kernel: tpu_custom_call.1
$region0: #{tpu_custom_call.1}
  #allocation0 [shape = 'u32[]', space=smem, size = 0x4, offset = 0x4, fixed_abs, tag = 'smem constant byte address 0x4 - core index']
  #allocation1 [shape = 'u32[144,128]{1,0:T(1,128)}', space=vmem, size = 0x12000, scoped, tag = 'internal scratch']
  #allocation2 [shape = 'f32[16,128]{1,0:T(8,128)}', space=vmem, size = 0x2000, scoped, tag = 'scratch operand']
  %s0 = inlined_call_operand.hbm [shape: f32[16,128], index: 0, kind: input, shape index: {}]
  %s1 = inlined_call_operand.hbm [shape: f32[128,128], index: 1, kind: input, shape index: {}]
  %s2 = inlined_call_operand.vmem [shape: f32[1,128], index: 2, kind: input, shape index: {}]
  %s3 = inlined_call_operand.hbm [shape: f32[128,128], index: 3, kind: input, shape index: {}]
  %s4 = inlined_call_operand.hbm [shape: f32[128,128], index: 4, kind: input, shape index: {}]
  %s5 = inlined_call_operand.hbm [shape: f32[16,128], index: 5, kind: output, shape index: {}]
  %s6 = sld [smem:[#allocation0]]
  $region50: #{tpu_custom_call.1} parent=0
    _
  %s8 = ssub.s32 1, %s6
  %s9 = scalar_select 0, %s8, %s6
  $region1: #{tpu_custom_call.1} parent=0
    #allocation3 [shape = 'u8[8192]{0}', space=vmem, size = 0x2000, scoped, tag = 'input window, operand 0, single buffered']
    #allocation4 [shape = 's32[1]{0}', space=sflag, size = 0x4, scoped, tag = 'scoped memory for tpu_custom_call.1']
    #allocation5 [shape = 's32[1]{0}', space=sflag, size = 0x4, scoped, tag = 'scoped memory for tpu_custom_call.1']
    #allocation6 [shape = 'u8[65536]{0}', space=vmem, size = 0x10000, scoped, tag = 'input window, operand 1, single buffered']
    #allocation7 [shape = 's32[1]{0}', space=sflag, size = 0x4, scoped, tag = 'scoped memory for tpu_custom_call.1']
    #allocation8 [shape = 'u8[65536]{0}', space=vmem, size = 0x10000, scoped, tag = 'input window, operand 3, single buffered']
    #allocation9 [shape = 'u8[65536]{0}', space=vmem, size = 0x10000, scoped, tag = 'input window, operand 4, single buffered']
    #allocation10 [shape = 's32[1]{0}', space=sflag, size = 0x4, scoped, tag = 'scoped memory for tpu_custom_call.1']
    #allocation11 [shape = 'u8[8192]{0}', space=vmem, size = 0x2000, scoped, tag = 'output window, operand 0, single buffered']
    %10 = vsyncpa [#allocation4], 0
    %11 = vsyncpa [#allocation7], 0
    %12 = vsyncpa [#allocation10], 0
    %13 = vsyncpa [#allocation5], 0
    // Predicated region
    $region2: #{tpu_custom_call.1} parent=1 // pred_check
      _
    $region3: #{tpu_custom_call.1} parent=1 // pred_check_branch
      %15 = sbr.rel (0) target = $region5
    $region4: #{tpu_custom_call.1} parent=1 // pred_region
      %s17 = ssub.s32 256, 256
      %18 = vsyncadd [#allocation4], %s17
      %s19 = sshll.u32 [#allocation3], 4
      %s20 = int_to_ptr.vmem [resolvable:$true] %s19
      %25 = dma.hbm_to_vmem [thread:$0]  %s0, 256, %s20, [#allocation4], 128, 128, 8
    $region5: #{tpu_custom_call.1} parent=1 // pred_fallthru
      _
    // Predicated region
    $region6: #{tpu_custom_call.1} parent=1 // pred_check
      _
    $region7: #{tpu_custom_call.1} parent=1 // pred_check_branch
      %27 = sbr.rel (0) target = $region9
    $region8: #{tpu_custom_call.1} parent=1 // pred_region
      %s29 = ssub.s32 2048, 2048
      %30 = vsyncadd [#allocation7], %s29
      %s31 = sshll.u32 [#allocation6], 4
      %s32 = int_to_ptr.vmem [resolvable:$true] %s31
      %37 = dma.hbm_to_vmem [thread:$0]  %s1, 2048, %s32, [#allocation7], 128, 128, 8
    $region9: #{tpu_custom_call.1} parent=1 // pred_fallthru
      _
    // Predicated region
    $region10: #{tpu_custom_call.1} parent=1 // pred_check
      _
    $region11: #{tpu_custom_call.1} parent=1 // pred_check_branch
      %39 = sbr.rel (0) target = $region13
    $region12: #{tpu_custom_call.1} parent=1 // pred_region
      _
    $region13: #{tpu_custom_call.1} parent=1 // pred_fallthru
      _
    // Predicated region
    $region14: #{tpu_custom_call.1} parent=1 // pred_check
      _
    $region15: #{tpu_custom_call.1} parent=1 // pred_check_branch
      %41 = sbr.rel (0) target = $region17
    $region16: #{tpu_custom_call.1} parent=1 // pred_region
      %s43 = ssub.s32 2048, 2048
      %44 = vsyncadd [#allocation7], %s43
      %s45 = sshll.u32 [#allocation8], 4
      %s46 = int_to_ptr.vmem [resolvable:$true] %s45
      %51 = dma.hbm_to_vmem [thread:$0]  %s3, 2048, %s46, [#allocation7], 128, 128, 8
    $region17: #{tpu_custom_call.1} parent=1 // pred_fallthru
      _
    // Predicated region
    $region18: #{tpu_custom_call.1} parent=1 // pred_check
      _
    $region19: #{tpu_custom_call.1} parent=1 // pred_check_branch
      %53 = sbr.rel (0) target = $region21
    $region20: #{tpu_custom_call.1} parent=1 // pred_region
      %s55 = ssub.s32 2048, 2048
      %56 = vsyncadd [#allocation10], %s55
      %s57 = sshll.u32 [#allocation9], 4
      %s58 = int_to_ptr.vmem [resolvable:$true] %s57
      %63 = dma.hbm_to_vmem [thread:$0]  %s4, 2048, %s58, [#allocation10], 128, 128, 8
    $region21: #{tpu_custom_call.1} parent=1 // pred_fallthru
      _
    // Predicated region
    $region22: #{tpu_custom_call.1} parent=1 // pred_check
      _
    $region23: #{tpu_custom_call.1} parent=1 // pred_check_branch
      %65 = sbr.rel (0) target = $region25
    $region24: #{tpu_custom_call.1} parent=1 // pred_region
      %66 = dma.done [#allocation4], 256
    $region25: #{tpu_custom_call.1} parent=1 // pred_fallthru
      _
    // Predicated region
    $region26: #{tpu_custom_call.1} parent=1 // pred_check
      _
    $region27: #{tpu_custom_call.1} parent=1 // pred_check_branch
      %68 = sbr.rel (0) target = $region29
    $region28: #{tpu_custom_call.1} parent=1 // pred_region
      %69 = dma.done [#allocation7], 2048
    $region29: #{tpu_custom_call.1} parent=1 // pred_fallthru
      _
    // Predicated region
    $region30: #{tpu_custom_call.1} parent=1 // pred_check
      _
    $region31: #{tpu_custom_call.1} parent=1 // pred_check_branch
      %71 = sbr.rel (0) target = $region33
    $region32: #{tpu_custom_call.1} parent=1 // pred_region
      %72 = dma.done [#allocation7], 2048
    $region33: #{tpu_custom_call.1} parent=1 // pred_fallthru
      _
    // Predicated region
    $region34: #{tpu_custom_call.1} parent=1 // pred_check
      _
    $region35: #{tpu_custom_call.1} parent=1 // pred_check_branch
      %74 = sbr.rel (0) target = $region37
    $region36: #{tpu_custom_call.1} parent=1 // pred_region
      %75 = dma.done [#allocation10], 2048
    $region37: #{tpu_custom_call.1} parent=1 // pred_fallthru
      _
    %p76 = scmp.eq.s32.totalorder 0, 0
    // Predicated region
    $region38: #{tpu_custom_call.1} parent=1 // pred_check
      %p77 = pneg %p76
    $region39: #{tpu_custom_call.1} parent=1 // pred_check_branch
      %79 = sbr.rel (%p77) target = $region41
    $region40: #{tpu_custom_call.1} parent=1 // pred_region
      %v80 = vld [vmem:[#allocation3] sm:$0xff]
      %v81 = vld [vmem:[#allocation3 + $0x8] sm:$0xff]
      %v82 = vld [vmem:[#allocation8] sm:$0xff]
      %v83 = vld [vmem:[#allocation8 + $0x8] sm:$0xff]
      %v84 = vld [vmem:[#allocation8 + $0x10] sm:$0xff]
      %v85 = vld [vmem:[#allocation8 + $0x18] sm:$0xff]
      %v86 = vld [vmem:[#allocation8 + $0x20] sm:$0xff]
      %v87 = vld [vmem:[#allocation8 + $0x28] sm:$0xff]
      %v88 = vld [vmem:[#allocation8 + $0x30] sm:$0xff]
      %v89 = vld [vmem:[#allocation8 + $0x38] sm:$0xff]
      %v90 = vld [vmem:[#allocation8 + $0x40] sm:$0xff]
      %v91 = vld [vmem:[#allocation8 + $0x48] sm:$0xff]
      %v92 = vld [vmem:[#allocation8 + $0x50] sm:$0xff]
      %v93 = vld [vmem:[#allocation8 + $0x58] sm:$0xff]
      %v94 = vld [vmem:[#allocation8 + $0x60] sm:$0xff]
      %v95 = vld [vmem:[#allocation8 + $0x68] sm:$0xff]
      %v96 = vld [vmem:[#allocation8 + $0x70] sm:$0xff]
      %v97 = vld [vmem:[#allocation8 + $0x78] sm:$0xff]
      %98 = vmatprep.subr.mxu0 0.0
      %99 = vmatpush1.xpose.msra.mxu0 %v97
      %100 = vmatprep.subr.mxu0 0.0
      %101 = vmatpush1.xpose.msra.mxu0 %v96
      %102 = vmatprep.subr.mxu0 0.0
      %103 = vmatpush1.xpose.msra.mxu0 %v95
      %104 = vmatprep.subr.mxu0 0.0
      %105 = vmatpush1.xpose.msra.mxu0 %v94
      %106 = vmatprep.subr.mxu0 0.0
      %107 = vmatpush1.xpose.msra.mxu0 %v93
      %108 = vmatprep.subr.mxu0 0.0
      %109 = vmatpush1.xpose.msra.mxu0 %v92
      %110 = vmatprep.subr.mxu0 0.0
      %111 = vmatpush1.xpose.msra.mxu0 %v91
      %112 = vmatprep.subr.mxu0 0.0
      %113 = vmatpush1.xpose.msra.mxu0 %v90
      %114 = vmatprep.subr.mxu0 0.0
      %115 = vmatpush1.xpose.msra.mxu0 %v89
      %116 = vmatprep.subr.mxu0 0.0
      %117 = vmatpush1.xpose.msra.mxu0 %v88
      %118 = vmatprep.subr.mxu0 0.0
      %119 = vmatpush1.xpose.msra.mxu0 %v87
      %120 = vmatprep.subr.mxu0 0.0
      %121 = vmatpush1.xpose.msra.mxu0 %v86
      %122 = vmatprep.subr.mxu0 0.0
      %123 = vmatpush1.xpose.msra.mxu0 %v85
      %124 = vmatprep.subr.mxu0 0.0
      %125 = vmatpush1.xpose.msra.mxu0 %v84
      %126 = vmatprep.subr.mxu0 0.0
      %127 = vmatpush1.xpose.msra.mxu0 %v83
      %128 = vmatprep.subr.mxu0 0.0
      %129 = vmatpush1.xpose.msra.mxu0 %v82
      %130 = vmatprep.subr.mxu0 0.0
      %131 = vmatpush2.xpose.msra.mxu0 0.0
      %132 = vmatprep.subr.mxu0 0.0
      %133 = vmatpush2.xpose.msra.mxu0 0.0
      %134 = vmatprep.subr.mxu0 0.0
      %135 = vmatpush2.xpose.msra.mxu0 0.0
      %136 = vmatprep.subr.mxu0 0.0
      %137 = vmatpush2.xpose.msra.mxu0 0.0
      %138 = vmatprep.subr.mxu0 0.0
      %139 = vmatpush2.xpose.msra.mxu0 0.0
      %140 = vmatprep.subr.mxu0 0.0
      %141 = vmatpush2.xpose.msra.mxu0 0.0
      %142 = vmatprep.subr.mxu0 0.0
      %143 = vmatpush2.xpose.msra.mxu0 0.0
      %144 = vmatprep.subr.mxu0 0.0
      %145 = vmatpush2.xpose.msra.mxu0 0.0
      %146 = vmatprep.subr.mxu0 0.0
      %147 = vmatpush2.xpose.msra.mxu0 0.0
      %148 = vmatprep.subr.mxu0 0.0
      %149 = vmatpush2.xpose.msra.mxu0 0.0
      %150 = vmatprep.subr.mxu0 0.0
      %151 = vmatpush2.xpose.msra.mxu0 0.0
      %152 = vmatprep.subr.mxu0 0.0
      %153 = vmatpush2.xpose.msra.mxu0 0.0
      %154 = vmatprep.subr.mxu0 0.0
      %155 = vmatpush2.xpose.msra.mxu0 0.0
      %156 = vmatprep.subr.mxu0 0.0
      %157 = vmatpush2.xpose.msra.mxu0 0.0
      %158 = vmatprep.subr.mxu0 0.0
      %159 = vmatpush2.xpose.msra.mxu0 0.0
      %160 = vmatprep.subr.mxu0 0.0
      %161 = vmatpush2.xpose.msra.mxu0 0.0
      %162 = vmatprep.mubr.f32.mxu0 0.0
      %163 = vmatmul.mubr.f32.gmra.mxu0 %v80
      %v164 = vpop.f32.mrf.mxu0
      %v165 = vadd.f32 0.0, %v164
      %v166 = vpop.f32.mrf.mxu0
      %167 = vmatprep.mubr.f32.mxu0 0.0
      %168 = vmatmul.mubr.f32.gmra.mxu0 %v81
      %v169 = vpop.f32.mrf.mxu0
      %v170 = vadd.f32 0.0, %v169
      %v171 = vpop.f32.mrf.mxu0
      %172 = vdwg.mxu0
      %173 = vst [vmem:[#allocation2] sm:$0xff] %v165
      %174 = vst [vmem:[#allocation2 + $0x8] sm:$0xff] %v170
    $region41: #{tpu_custom_call.1} parent=1 // pred_fallthru
      _
    %v175 = vld [vmem:[#allocation3] sm:$0xff]
    %v176 = vld [vmem:[#allocation3 + $0x8] sm:$0xff]
    %v177 = vld [vmem:[#allocation6] sm:$0xff]
    %v178 = vld [vmem:[#allocation6 + $0x8] sm:$0xff]
    %v179 = vld [vmem:[#allocation6 + $0x10] sm:$0xff]
    %v180 = vld [vmem:[#allocation6 + $0x18] sm:$0xff]
    %v181 = vld [vmem:[#allocation6 + $0x20] sm:$0xff]
    %v182 = vld [vmem:[#allocation6 + $0x28] sm:$0xff]
    %v183 = vld [vmem:[#allocation6 + $0x30] sm:$0xff]
    %v184 = vld [vmem:[#allocation6 + $0x38] sm:$0xff]
    %v185 = vld [vmem:[#allocation6 + $0x40] sm:$0xff]
    %v186 = vld [vmem:[#allocation6 + $0x48] sm:$0xff]
    %v187 = vld [vmem:[#allocation6 + $0x50] sm:$0xff]
    %v188 = vld [vmem:[#allocation6 + $0x58] sm:$0xff]
    %v189 = vld [vmem:[#allocation6 + $0x60] sm:$0xff]
    %v190 = vld [vmem:[#allocation6 + $0x68] sm:$0xff]
    %v191 = vld [vmem:[#allocation6 + $0x70] sm:$0xff]
    %v192 = vld [vmem:[#allocation6 + $0x78] sm:$0xff]
    %v193 = vld [vmem:[#allocation2] sm:$0xff]
    %v194 = vld [vmem:[#allocation2 + $0x8] sm:$0xff]
    %v195 = vld [vmem:[#allocation9] sm:$0xff]
    %v196 = vld [vmem:[#allocation9 + $0x8] sm:$0xff]
    %v197 = vld [vmem:[#allocation9 + $0x10] sm:$0xff]
    %v198 = vld [vmem:[#allocation9 + $0x18] sm:$0xff]
    %v199 = vld [vmem:[#allocation9 + $0x20] sm:$0xff]
    %v200 = vld [vmem:[#allocation9 + $0x28] sm:$0xff]
    %v201 = vld [vmem:[#allocation9 + $0x30] sm:$0xff]
    %v202 = vld [vmem:[#allocation9 + $0x38] sm:$0xff]
    %v203 = vld [vmem:[#allocation9 + $0x40] sm:$0xff]
    %v204 = vld [vmem:[#allocation9 + $0x48] sm:$0xff]
    %v205 = vld [vmem:[#allocation9 + $0x50] sm:$0xff]
    %v206 = vld [vmem:[#allocation9 + $0x58] sm:$0xff]
    %v207 = vld [vmem:[#allocation9 + $0x60] sm:$0xff]
    %v208 = vld [vmem:[#allocation9 + $0x68] sm:$0xff]
    %v209 = vld [vmem:[#allocation9 + $0x70] sm:$0xff]
    %v210 = vld [vmem:[#allocation9 + $0x78] sm:$0xff]
    %211 = vmatprep.subr.mxu0 0.0
    %212 = vmatpush1.xpose.msra.mxu0 %v210
    %213 = vmatprep.subr.mxu0 0.0
    %214 = vmatpush1.xpose.msra.mxu0 %v209
    %215 = vmatprep.subr.mxu0 0.0
    %216 = vmatpush1.xpose.msra.mxu0 %v208
    %217 = vmatprep.subr.mxu0 0.0
    %218 = vmatpush1.xpose.msra.mxu0 %v207
    %219 = vmatprep.subr.mxu0 0.0
    %220 = vmatpush1.xpose.msra.mxu0 %v206
    %221 = vmatprep.subr.mxu0 0.0
    %222 = vmatpush1.xpose.msra.mxu0 %v205
    %223 = vmatprep.subr.mxu0 0.0
    %224 = vmatpush1.xpose.msra.mxu0 %v204
    %225 = vmatprep.subr.mxu0 0.0
    %226 = vmatpush1.xpose.msra.mxu0 %v203
    %227 = vmatprep.subr.mxu0 0.0
    %228 = vmatpush1.xpose.msra.mxu0 %v202
    %229 = vmatprep.subr.mxu0 0.0
    %230 = vmatpush1.xpose.msra.mxu0 %v201
    %231 = vmatprep.subr.mxu0 0.0
    %232 = vmatpush1.xpose.msra.mxu0 %v200
    %233 = vmatprep.subr.mxu0 0.0
    %234 = vmatpush1.xpose.msra.mxu0 %v199
    %235 = vmatprep.subr.mxu0 0.0
    %236 = vmatpush1.xpose.msra.mxu0 %v198
    %237 = vmatprep.subr.mxu0 0.0
    %238 = vmatpush1.xpose.msra.mxu0 %v197
    %239 = vmatprep.subr.mxu0 0.0
    %240 = vmatpush1.xpose.msra.mxu0 %v196
    %241 = vmatprep.subr.mxu0 0.0
    %242 = vmatpush1.xpose.msra.mxu0 %v195
    %243 = vmatprep.subr.mxu0 0.0
    %244 = vmatpush2.xpose.msra.mxu0 0.0
    %245 = vmatprep.subr.mxu0 0.0
    %246 = vmatpush2.xpose.msra.mxu0 0.0
    %247 = vmatprep.subr.mxu0 0.0
    %248 = vmatpush2.xpose.msra.mxu0 0.0
    %249 = vmatprep.subr.mxu0 0.0
    %250 = vmatpush2.xpose.msra.mxu0 0.0
    %251 = vmatprep.subr.mxu0 0.0
    %252 = vmatpush2.xpose.msra.mxu0 0.0
    %253 = vmatprep.subr.mxu0 0.0
    %254 = vmatpush2.xpose.msra.mxu0 0.0
    %255 = vmatprep.subr.mxu0 0.0
    %256 = vmatpush2.xpose.msra.mxu0 0.0
    %257 = vmatprep.subr.mxu0 0.0
    %258 = vmatpush2.xpose.msra.mxu0 0.0
    %259 = vmatprep.subr.mxu0 0.0
    %260 = vmatpush2.xpose.msra.mxu0 0.0
    %261 = vmatprep.subr.mxu0 0.0
    %262 = vmatpush2.xpose.msra.mxu0 0.0
    %263 = vmatprep.subr.mxu0 0.0
    %264 = vmatpush2.xpose.msra.mxu0 0.0
    %265 = vmatprep.subr.mxu0 0.0
    %266 = vmatpush2.xpose.msra.mxu0 0.0
    %267 = vmatprep.subr.mxu0 0.0
    %268 = vmatpush2.xpose.msra.mxu0 0.0
    %269 = vmatprep.subr.mxu0 0.0
    %270 = vmatpush2.xpose.msra.mxu0 0.0
    %271 = vmatprep.subr.mxu0 0.0
    %272 = vmatpush2.xpose.msra.mxu0 0.0
    %273 = vmatprep.subr.mxu0 0.0
    %274 = vmatpush2.xpose.msra.mxu0 0.0
    %275 = vmatprep.mubr.f32.mxu0 0.0
    %276 = vmatmul.mubr.f32.gmra.mxu0 %v193
    %v277 = vpop.f32.mrf.mxu0
    %v278 = vadd.f32 0.0, %v277
    %v279 = vpop.f32.mrf.mxu0
    %280 = vmatprep.mubr.f32.mxu0 0.0
    %281 = vmatmul.mubr.f32.gmra.mxu0 %v194
    %v282 = vpop.f32.mrf.mxu0
    %v283 = vadd.f32 0.0, %v282
    %v284 = vpop.f32.mrf.mxu0
    %285 = vdwg.mxu0
    %v286 = vld [vmem:[%s2] sm:$0x1]
    %v288 = vlaneseq
    %v289 = vshrl.u32 %v288, 7
    %v290 = vsub.s32 0, %v289
    %v291 = vrot.slane %v286, %v290
    %293 = vmatprep.subr.mxu0 0.0
    %294 = vmatpush1.xpose.msra.mxu0 %v192
    %295 = vmatprep.subr.mxu0 0.0
    %296 = vmatpush1.xpose.msra.mxu0 %v191
    %297 = vmatprep.subr.mxu0 0.0
    %298 = vmatpush1.xpose.msra.mxu0 %v190
    %299 = vmatprep.subr.mxu0 0.0
    %300 = vmatpush1.xpose.msra.mxu0 %v189
    %301 = vmatprep.subr.mxu0 0.0
    %302 = vmatpush1.xpose.msra.mxu0 %v188
    %303 = vmatprep.subr.mxu0 0.0
    %304 = vmatpush1.xpose.msra.mxu0 %v187
    %305 = vmatprep.subr.mxu0 0.0
    %306 = vmatpush1.xpose.msra.mxu0 %v186
    %307 = vmatprep.subr.mxu0 0.0
    %308 = vmatpush1.xpose.msra.mxu0 %v185
    %309 = vmatprep.subr.mxu0 0.0
    %310 = vmatpush1.xpose.msra.mxu0 %v184
    %311 = vmatprep.subr.mxu0 0.0
    %312 = vmatpush1.xpose.msra.mxu0 %v183
    %313 = vmatprep.subr.mxu0 0.0
    %314 = vmatpush1.xpose.msra.mxu0 %v182
    %315 = vmatprep.subr.mxu0 0.0
    %316 = vmatpush1.xpose.msra.mxu0 %v181
    %317 = vmatprep.subr.mxu0 0.0
    %318 = vmatpush1.xpose.msra.mxu0 %v180
    %319 = vmatprep.subr.mxu0 0.0
    %320 = vmatpush1.xpose.msra.mxu0 %v179
    %321 = vmatprep.subr.mxu0 0.0
    %322 = vmatpush1.xpose.msra.mxu0 %v178
    %323 = vmatprep.subr.mxu0 0.0
    %324 = vmatpush1.xpose.msra.mxu0 %v177
    %325 = vmatprep.subr.mxu0 0.0
    %326 = vmatpush2.xpose.msra.mxu0 0.0
    %327 = vmatprep.subr.mxu0 0.0
    %328 = vmatpush2.xpose.msra.mxu0 0.0
    %329 = vmatprep.subr.mxu0 0.0
    %330 = vmatpush2.xpose.msra.mxu0 0.0
    %331 = vmatprep.subr.mxu0 0.0
    %332 = vmatpush2.xpose.msra.mxu0 0.0
    %333 = vmatprep.subr.mxu0 0.0
    %334 = vmatpush2.xpose.msra.mxu0 0.0
    %335 = vmatprep.subr.mxu0 0.0
    %336 = vmatpush2.xpose.msra.mxu0 0.0
    %337 = vmatprep.subr.mxu0 0.0
    %338 = vmatpush2.xpose.msra.mxu0 0.0
    %339 = vmatprep.subr.mxu0 0.0
    %340 = vmatpush2.xpose.msra.mxu0 0.0
    %341 = vmatprep.subr.mxu0 0.0
    %342 = vmatpush2.xpose.msra.mxu0 0.0
    %343 = vmatprep.subr.mxu0 0.0
    %344 = vmatpush2.xpose.msra.mxu0 0.0
    %345 = vmatprep.subr.mxu0 0.0
    %346 = vmatpush2.xpose.msra.mxu0 0.0
    %347 = vmatprep.subr.mxu0 0.0
    %348 = vmatpush2.xpose.msra.mxu0 0.0
    %349 = vmatprep.subr.mxu0 0.0
    %350 = vmatpush2.xpose.msra.mxu0 0.0
    %351 = vmatprep.subr.mxu0 0.0
    %352 = vmatpush2.xpose.msra.mxu0 0.0
    %353 = vmatprep.subr.mxu0 0.0
    %354 = vmatpush2.xpose.msra.mxu0 0.0
    %355 = vmatprep.subr.mxu0 0.0
    %356 = vmatpush2.xpose.msra.mxu0 0.0
    %357 = vmatprep.mubr.f32.mxu0 0.0
    %358 = vmatmul.mubr.f32.gmra.mxu0 %v175
    %v359 = vpop.f32.mrf.mxu0
    %v360 = vadd.f32 %v291, %v359
    %v361 = vpop.f32.mrf.mxu0
    %362 = vmatprep.mubr.f32.mxu0 0.0
    %363 = vmatmul.mubr.f32.gmra.mxu0 %v176
    %v364 = vpop.f32.mrf.mxu0
    %v365 = vadd.f32 %v291, %v364
    %v366 = vpop.f32.mrf.mxu0
    %367 = vdwg.mxu0
    %v368 = vadd.f32 %v360, %v278
    %v369 = vadd.f32 %v365, %v283
    %370 = vst [vmem:[#allocation11] sm:$0xff] %v368
    %371 = vst [vmem:[#allocation11 + $0x8] sm:$0xff] %v369
    // Predicated region
    $region42: #{tpu_custom_call.1} parent=1 // pred_check
      _
    $region43: #{tpu_custom_call.1} parent=1 // pred_check_branch
      %373 = sbr.rel (0) target = $region45
    $region44: #{tpu_custom_call.1} parent=1 // pred_region
      %s375 = ssub.s32 256, 256
      %376 = vsyncadd [#allocation5], %s375
      %s377 = sshll.u32 [#allocation11], 4
      %s378 = int_to_ptr.vmem [resolvable:$true] %s377
      %383 = dma.vmem_to_hbm [thread:$0]  %s378, 256, %s5, [#allocation5], 128, 128, 8
    $region45: #{tpu_custom_call.1} parent=1 // pred_fallthru
      _
    // Predicated region
    $region46: #{tpu_custom_call.1} parent=1 // pred_check
      _
    $region47: #{tpu_custom_call.1} parent=1 // pred_check_branch
      %385 = sbr.rel (0) target = $region49
    $region48: #{tpu_custom_call.1} parent=1 // pred_region
      %386 = dma.done [#allocation5], 256
    $region49: #{tpu_custom_call.1} parent=1 // pred_fallthru
      _
    %387 = vsyncpa [#allocation4], 1
    %388 = vsyncpa [#allocation7], 1
    %389 = vsyncpa [#allocation10], 1
    %390 = vsyncpa [#allocation5], 1

</llo_original>
